<compile_context>
chip_gen: v6e
topology: v6e:2x2x1
jax: 0.10.0
libtpu: 0.0.40
codegen_flags: <defaults>
</compile_context>

<pallas_src>
import jax
import jax.numpy as jnp
from jax.experimental import pallas as pl
from jax.experimental.pallas import tpu as pltpu


def _phase_decomposed_weights(weight, stride):
    """Sub-pixel (phase) decomposition of ConvTranspose2d weights.

    weight: (Cin, Cout, K, K)  -- torch ConvTranspose2d layout.
    Returns (w_T, Ku, T):
      w_T: (s*s*Cout, Ku*Ku*Cin) transposed stride-1 conv weights over the DENSE
           input.  Row order is (co, r, t) (channel, row-phase, col-phase); column
           order is (u, v, ci) (window tap, input channel) -- matches the im2col.
      Ku : uniform spatial window size over the dense input (2 for K=3, s=2).
      T  : zero-halo rows/cols needed at the top/left of the dense input.
    """
    Cin, Cout, K, _ = weight.shape
    s = stride
    padding = (K - 1) // 2
    pad = K - 1 - padding                       # conv-equivalent padding

    # stride-1 conv weights equivalent to the transposed conv (flip + swap):
    # w_conv[kh, kw, ci, co] = weight[ci, co, K-1-kh, K-1-kw]
    w_conv = jnp.transpose(weight[:, :, ::-1, ::-1], (2, 3, 0, 1))

    # For output phase r (output row = q*s + r) the contributing taps are
    # kh = kh0[r] + m*s and they read dense-input row q + m - a[r].
    kh0 = [(pad - r) % s for r in range(s)]
    a = [(pad - r) // s for r in range(s)]
    ntap = [len(range(kh0[r], K, s)) for r in range(s)]
    T = max(0, max(a))
    d = [T - a[r] for r in range(s)]            # phase offset inside the window
    Ku = max(1, max(ntap[r] + d[r] for r in range(s)))

    w_uni = jnp.zeros((Ku, Ku, Cin, s, s, Cout), w_conv.dtype)
    for r in range(s):
        for m in range(ntap[r]):
            u, kh = m + d[r], kh0[r] + m * s
            for t in range(s):
                for n in range(ntap[t]):
                    v, kw = n + d[t], kh0[t] + n * s
                    w_uni = w_uni.at[u, v, :, r, t, :].set(w_conv[kh, kw])

    # Row = (co*s + r)*s + t, Col = (u*Ku + v)*Cin + ci.
    w_T = jnp.transpose(w_uni, (5, 3, 4, 0, 1, 2)).reshape(s * s * Cout,
                                                           Ku * Ku * Cin)
    return w_T, Ku, T


def _deconv_kernel(x_ref, w_ref, b_ref, o_ref):
    """One (batch, row-tile) grid step -- a single dense MXU push.

    x_ref: (1, KKC, TQ*Pmax)  im2col'd dense input: taps+Cin in sublanes,
                              coarse spatial positions dense in lanes.
    w_ref: (ssc, KKC)         phase-folded transposed-conv weights.
    b_ref: (ssc, 1)           bias replicated over the s*s output phases.
    o_ref: (1, ssc, TQ*Pmax)  channels/phases in sublanes, spatial in lanes.
    """
    acc = jnp.dot(w_ref[...], x_ref[0], preferred_element_type=jnp.float32)
    o_ref[0] = (acc + b_ref[...].astype(jnp.float32)).astype(o_ref.dtype)


def _pick_row_tile(Qmax, Pmax, KKC, ssc, itemsize=4):
    """Largest row tile whose double-buffered in/out blocks fit a VMEM budget."""
    try:
        vmem = pltpu.get_tpu_info().vmem_capacity_bytes
    except Exception:
        vmem = 64 << 20                                   # v7x-safe fallback
    budget = min(vmem // 4, 16 << 20)                     # under default scoped VMEM

    def blk_bytes(tq):
        return 2 * (KKC + ssc) * tq * Pmax * itemsize     # double-buffered in + out

    if blk_bytes(Qmax) <= budget:
        return Qmax                                       # whole image -> grid (N, 1)
    for tq in range(Qmax // 2, 0, -1):
        # last block dim must be a multiple of 128 (or the full extent)
        if Qmax % tq == 0 and (tq * Pmax) % 128 == 0 and blk_bytes(tq) <= budget:
            return tq
    # TODO(synk): pad Qmax*Pmax / raise vmem_limit_bytes for shapes with no valid tiling.
    return Qmax


def deconv2d(x_nchw, weight, bias, *, stride):
    """ConvTranspose2d forward, PyTorch semantics (padding=(K-1)//2).

    x_nchw : (N, Cin, H, W)
    weight : (Cin, Cout, K, K)   torch ConvTranspose2d weight layout
    bias   : (Cout,)
    """
    N, Cin, H, W = x_nchw.shape
    _, Cout, K, _ = weight.shape
    s = stride
    padding = (K - 1) // 2
    Ho = (H - 1) * s - 2 * padding + K
    Wo = (W - 1) * s - 2 * padding + K

    w_T, Ku, T = _phase_decomposed_weights(weight, s)
    ssc = s * s * Cout
    KKC = Ku * Ku * Cin
    bvec = jnp.repeat(bias, s * s).reshape(ssc, 1)        # row order (co, r, t)

    # Phase grid: Qmax x Pmax coarse pixels, each carrying s*s output pixels.
    Qmax = -(-Ho // s)
    Pmax = -(-Wo // s)

    # Dense NCHW input with just enough zero halo for every phase window,
    # im2col'd so the kernel sees a relayout-free, lane-dense (KKC, Q*P) slab.
    bot_h = max(0, Qmax + Ku - 1 - T - H)
    bot_w = max(0, Pmax + Ku - 1 - T - W)
    xh = jnp.pad(x_nchw, ((0, 0), (0, 0), (T, bot_h), (T, bot_w)))
    taps = [xh[:, :, u:u + Qmax, v:v + Pmax]              # each (N, Cin, Qmax, Pmax)
            for u in range(Ku) for v in range(Ku)]
    xcol = jnp.stack(taps, axis=1).reshape(N, KKC, Qmax * Pmax)

    TQ = _pick_row_tile(Qmax, Pmax, KKC, ssc)
    QT = Qmax // TQ

    out_k = pl.pallas_call(
        _deconv_kernel,
        out_shape=jax.ShapeDtypeStruct((N, ssc, Qmax * Pmax), x_nchw.dtype),
        grid=(N, QT),
        in_specs=[
            pl.BlockSpec((1, KKC, TQ * Pmax), lambda b, q: (b, 0, q)),
            pl.BlockSpec((ssc, KKC), lambda b, q: (0, 0)),
            pl.BlockSpec((ssc, 1), lambda b, q: (0, 0)),
        ],
        out_specs=pl.BlockSpec((1, ssc, TQ * Pmax), lambda b, q: (b, 0, q)),
        compiler_params=pltpu.CompilerParams(
            dimension_semantics=("parallel", "parallel")),
    )(xcol, w_T, bvec)

    # Single wrapper pass: pixel-shuffle + crop; output is already channels-first.
    out = out_k.reshape(N, Cout, s, s, Qmax, Pmax)        # (b, co, r, t, q, p)
    out = out.transpose(0, 1, 4, 2, 5, 3)                 # (b, co, q, r, p, t)
    out = out.reshape(N, Cout, Qmax * s, Pmax * s)
    return out[:, :, :Ho, :Wo]


def _reference_deconv2d(x_nchw, weight, bias, *, stride):
    """Pure-JAX reference (XLA conv) with identical ConvTranspose2d semantics."""
    Cin, Cout, K, _ = weight.shape
    padding = (K - 1) // 2
    w_conv = jnp.transpose(weight[:, :, ::-1, ::-1], (1, 0, 2, 3))   # OIHW
    out = jax.lax.conv_general_dilated(
        x_nchw, w_conv,
        window_strides=(1, 1),
        padding=[(K - 1 - padding, K - 1 - padding)] * 2,
        lhs_dilation=(stride, stride),
        dimension_numbers=("NCHW", "OIHW", "NCHW"),
    )
    return out + bias.reshape(1, Cout, 1, 1)


if __name__ == "__main__":
    in_channels, out_channels = 4, 4
    kernel_size, stride = 3, 2
    N, H, W = 2, 16, 16

    key = jax.random.PRNGKey(0)
    kx, kw, kb = jax.random.split(key, 3)
    x = jax.random.normal(kx, (N, in_channels, H, W), dtype=jnp.float32)
    # torch ConvTranspose2d weight shape: (in_channels, out_channels, K, K)
    weight = 0.1 * jax.random.normal(
        kw, (in_channels, out_channels, kernel_size, kernel_size),
        dtype=jnp.float32)
    bias = 0.1 * jax.random.normal(kb, (out_channels,), dtype=jnp.float32)

    out = jax.block_until_ready(deconv2d(x, weight, bias, stride=stride))
    ref = jax.block_until_ready(
        _reference_deconv2d(x, weight, bias, stride=stride))

    Ho = (H - 1) * stride - 2 * ((kernel_size - 1) // 2) + kernel_size
    assert out.shape == ref.shape == (N, out_channels, Ho, Ho)
    assert jnp.allclose(out, ref, atol=1e-4, rtol=1e-4), \
        float(jnp.max(jnp.abs(out - ref)))

    print("KERNEL_OK")
</pallas_src>

<mosaic_0001>
module attributes {stable_mosaic.version = 11 : i64} {
  func.func @_deconv_kernel(%arg0: i32, %arg1: i32, %arg2: memref<1x16x256xf32, #tpu.memory_space<vmem>>, %arg3: memref<16x16xf32, #tpu.memory_space<vmem>>, %arg4: memref<16x1xf32, #tpu.memory_space<vmem>>, %arg5: memref<1x16x256xf32, #tpu.memory_space<vmem>>) attributes {dimension_semantics = [#tpu.dimension_semantics<parallel>, #tpu.dimension_semantics<parallel>], iteration_bounds = array<i64: 2, 1>, scalar_prefetch = 0 : i64, scratch_operands = 0 : i64, tpu.core_type = #tpu.core_type<tc>, window_params = [{transform_indices = @transform_0, window_bounds = array<i64: 1, 16, 256>}, {pipeline_mode = #tpu.pipeline_mode<synchronous>, transform_indices = @transform_1, window_bounds = array<i64: 16, 16>}, {pipeline_mode = #tpu.pipeline_mode<synchronous>, transform_indices = @transform_2, window_bounds = array<i64: 16, 1>}, {transform_indices = @transform_3, window_bounds = array<i64: 1, 16, 256>}]} {
    %c0 = arith.constant 0 : index
    %c0_0 = arith.constant 0 : index
    %0 = vector.load %arg3[%c0, %c0_0] : memref<16x16xf32, #tpu.memory_space<vmem>>, vector<16x16xf32>
    %c0_1 = arith.constant 0 : index
    %c0_2 = arith.constant 0 : index
    %c0_3 = arith.constant 0 : index
    %1 = vector.load %arg2[%c0_1, %c0_2, %c0_3] : memref<1x16x256xf32, #tpu.memory_space<vmem>>, vector<1x16x256xf32>
    %2 = vector.shape_cast %1 : vector<1x16x256xf32> to vector<16x256xf32>
    %cst = arith.constant dense<0.000000e+00> : vector<16x256xf32>
    %3 = tpu.matmul %0, %2, %cst {dimension_numbers = #tpu.dot_dimension_numbers<[1], [0], [0], [1], [0, 0, 1, 1], [], []>} : vector<16x16xf32>, vector<16x256xf32>, vector<16x256xf32> -> vector<16x256xf32>
    %c0_4 = arith.constant 0 : index
    %c0_5 = arith.constant 0 : index
    %4 = vector.load %arg4[%c0_4, %c0_5] : memref<16x1xf32, #tpu.memory_space<vmem>>, vector<16x1xf32>
    %5 = vector.broadcast %4 : vector<16x1xf32> to vector<16x256xf32>
    %6 = arith.addf %3, %5 : vector<16x256xf32>
    %c0_6 = arith.constant 0 : index
    %c0_7 = arith.constant 0 : index
    %c0_8 = arith.constant 0 : index
    %7 = vector.load %arg5[%c0_6, %c0_7, %c0_8] : memref<1x16x256xf32, #tpu.memory_space<vmem>>, vector<1x16x256xf32>
    %8 = vector.shape_cast %7 : vector<1x16x256xf32> to vector<16x256xf32>
    %9 = vector.shape_cast %6 : vector<16x256xf32> to vector<1x16x256xf32>
    tpu.vector_store %arg5[%c0_6, %c0_7, %c0_8], %9 {strides = array<i32>} : memref<1x16x256xf32, #tpu.memory_space<vmem>>, vector<1x16x256xf32>,
    return
  }
  func.func @transform_0(%arg0: i32, %arg1: i32) -> (i32, i32, i32) {
    %c0_i32 = arith.constant 0 : i32
    %c0_i32_0 = arith.constant 0 : i32
    return %arg0, %c0_i32, %arg1 : i32, i32, i32
  }
  func.func @transform_1(%arg0: i32, %arg1: i32) -> (i32, i32) {
    %c0_i32 = arith.constant 0 : i32
    %c0_i32_0 = arith.constant 0 : i32
    %c0_i32_1 = arith.constant 0 : i32
    return %c0_i32, %c0_i32_0 : i32, i32
  }
  func.func @transform_2(%arg0: i32, %arg1: i32) -> (i32, i32) {
    %c0_i32 = arith.constant 0 : i32
    %c0_i32_0 = arith.constant 0 : i32
    %c0_i32_1 = arith.constant 0 : i32
    return %c0_i32, %c0_i32_0 : i32, i32
  }
  func.func @transform_3(%arg0: i32, %arg1: i32) -> (i32, i32, i32) {
    %c0_i32 = arith.constant 0 : i32
    %c0_i32_0 = arith.constant 0 : i32
    return %arg0, %c0_i32, %arg1 : i32, i32, i32
  }
}

</mosaic_0001>

<llo_original>
// kernel: tpu_custom_call.1
$region0: #{tpu_custom_call.1}
  #allocation0 [shape = 'u32[]', space=smem, size = 0x4, offset = 0x4, fixed_abs, tag = 'smem constant byte address 0x4 - core index']
  #allocation1 [shape = 'u32[144,128]{1,0:T(1,128)}', space=vmem, size = 0x12000, scoped, tag = 'internal scratch']
  %s0 = inlined_call_operand.hbm [shape: f32[2,16,256], index: 0, kind: input, shape index: {}]
  %s1 = inlined_call_operand.vmem [shape: f32[16,16], index: 1, kind: input, shape index: {}]
  %s2 = inlined_call_operand.vmem [shape: f32[16,1], index: 2, kind: input, shape index: {}]
  %s3 = inlined_call_operand.hbm [shape: f32[2,16,256], index: 3, kind: output, shape index: {}]
  %s4 = sld [smem:[#allocation0]]
  $region49: #{tpu_custom_call.1} parent=0
    _
  %s6 = ssub.s32 1, %s4
  %s7 = scalar_select 0, %s6, %s4
  $region1: #{tpu_custom_call.1} parent=0
    #allocation2 [shape = 'u8[32768]{0}', space=vmem, size = 0x8000, scoped, tag = 'input window, operand 0']
    #allocation3 [shape = 's32[2]{0}', space=sflag, size = 0x8, scoped, tag = 'scoped memory for tpu_custom_call.1']
    #allocation4 [shape = 's32[2]{0}', space=sflag, size = 0x8, scoped, tag = 'scoped memory for tpu_custom_call.1']
    #allocation5 [shape = 'u8[32768]{0}', space=vmem, size = 0x8000, scoped, tag = 'output window, operand 0']
    %8 = vsyncpa [#allocation3], 0
    %s9 = scalar_lea.sflag [#allocation3], 1
    %10 = vsyncpa %s9, 0
    %11 = vsyncpa [#allocation4], 0
    %s12 = scalar_lea.sflag [#allocation4], 1
    %13 = vsyncpa %s12, 0
    loop: start=0, step=1, limit=4
    $region2: #{tpu_custom_call.1} parent=1 // loop_pre_header
      _
    $region3: #{tpu_custom_call.1} parent=1 // loop_header
      %s15 = sphi 0, %s19
      %p16 = scmp.ge.s32.totalorder %s15, 4
      %s22 = sphi 0, %s34
      %s23 = sphi 0, %s30
      %s24 = sphi 0, %s22
      %s25 = sphi 0, %s23
      %s26 = sphi 0, %s24
      %s27 = sphi 0, %s25
      %s39 = sphi 0, %s41
      %s42 = sphi 0, %s39
      %s43 = sphi 0, %s42
      %s59 = sphi 0, %s43
      %s63 = sphi 0, %s63
      %s65 = sphi 0, %s63
      %s66 = sphi 0, %s65
      %s80 = sphi 0, %s66
      %s84 = sphi 0, %s84
      %s86 = sphi 0, %s84
      %s87 = sphi 0, %s86
      %s101 = sphi 0, %s87
      %s109 = sphi 0, %s111
      %s112 = sphi 0, %s109
      %s113 = sphi 0, %s112
      %s129 = sphi 0, %s113
    $region4: #{tpu_custom_call.1} parent=1 // loop_header_branch
      %18 = sbr.rel (%p16) target = $region8
    $region5: #{tpu_custom_call.1} parent=1 // loop_body
      %s20 = ssub.s32 %s15, 1
      %s21 = ssub.s32 %s15, 2
      %s28 = sadd.s32 1, %s23
      %p29 = scmp.ge.s32.totalorder %s28, 1
      %s30 = scalar_select %p29, 0, %s28
      %s31 = sadd.s32 1, %s22
      %s32 = scalar_select %p29, %s31, %s22
      %p33 = scmp.ge.s32.totalorder %s32, 2
      %s34 = scalar_select %p33, 0, %s32
      %s35 = ssub.s32 %s22, %s34
      %s36 = ssub.s32 %s23, %s30
      %s37 = sor.u32 %s35, %s36
      %p38 = scmp.eq.s32.totalorder %s37, 0
      %s40 = sadd.s32 %s39, 1
      %s41 = scalar_select %p38, %s39, %s40
      %p44 = pneg %p38
      %p45 = scmp.eq.s32.totalorder %s15, 1
      %p46 = por %p44, %p45
      %p47 = scmp.ne.s32.totalorder %s39, %s42
      %p48 = scmp.eq.s32.totalorder %s15, 0
      %p49 = por %p47, %p48
      %p50 = scmp.ne.s32.totalorder %s39, %s42
      %p51 = scmp.eq.s32.totalorder %s20, 1
      %p52 = por %p50, %p51
      %p53 = scmp.ne.s32.totalorder %s42, %s43
      %p54 = scmp.eq.s32.totalorder %s20, 0
      %p55 = por %p53, %p54
      %p56 = scmp.ne.s32.totalorder %s42, %s43
      %p57 = scmp.eq.s32.totalorder %s21, 1
      %p58 = por %p56, %p57
      %p60 = scmp.ne.s32.totalorder %s43, %s59
      %p61 = scmp.eq.s32.totalorder %s21, 0
      %p62 = por %p60, %p61
      %s64 = sadd.s32 %s63, 1
      %p67 = scmp.eq.s32.totalorder %s15, 1
      %p68 = scmp.ne.s32.totalorder %s63, %s65
      %p69 = scmp.eq.s32.totalorder %s15, 0
      %p70 = por %p68, %p69
      %p71 = scmp.ne.s32.totalorder %s63, %s65
      %p72 = scmp.eq.s32.totalorder %s20, 1
      %p73 = por %p71, %p72
      %p74 = scmp.ne.s32.totalorder %s65, %s66
      %p75 = scmp.eq.s32.totalorder %s20, 0
      %p76 = por %p74, %p75
      %p77 = scmp.ne.s32.totalorder %s65, %s66
      %p78 = scmp.eq.s32.totalorder %s21, 1
      %p79 = por %p77, %p78
      %p81 = scmp.ne.s32.totalorder %s66, %s80
      %p82 = scmp.eq.s32.totalorder %s21, 0
      %p83 = por %p81, %p82
      %s85 = sadd.s32 %s84, 1
      %p88 = scmp.eq.s32.totalorder %s15, 1
      %p89 = scmp.ne.s32.totalorder %s84, %s86
      %p90 = scmp.eq.s32.totalorder %s15, 0
      %p91 = por %p89, %p90
      %p92 = scmp.ne.s32.totalorder %s84, %s86
      %p93 = scmp.eq.s32.totalorder %s20, 1
      %p94 = por %p92, %p93
      %p95 = scmp.ne.s32.totalorder %s86, %s87
      %p96 = scmp.eq.s32.totalorder %s20, 0
      %p97 = por %p95, %p96
      %p98 = scmp.ne.s32.totalorder %s86, %s87
      %p99 = scmp.eq.s32.totalorder %s21, 1
      %p100 = por %p98, %p99
      %p102 = scmp.ne.s32.totalorder %s87, %s101
      %p103 = scmp.eq.s32.totalorder %s21, 0
      %p104 = por %p102, %p103
      %s105 = ssub.s32 %s22, %s34
      %s106 = ssub.s32 %s23, %s30
      %s107 = sor.u32 %s105, %s106
      %p108 = scmp.eq.s32.totalorder %s107, 0
      %s110 = sadd.s32 %s109, 1
      %s111 = scalar_select %p108, %s109, %s110
      %p114 = pneg %p108
      %p115 = scmp.eq.s32.totalorder %s15, 1
      %p116 = por %p114, %p115
      %p117 = scmp.ne.s32.totalorder %s109, %s112
      %p118 = scmp.eq.s32.totalorder %s15, 0
      %p119 = por %p117, %p118
      %p120 = scmp.ne.s32.totalorder %s109, %s112
      %p121 = scmp.eq.s32.totalorder %s20, 1
      %p122 = por %p120, %p121
      %p123 = scmp.ne.s32.totalorder %s112, %s113
      %p124 = scmp.eq.s32.totalorder %s20, 0
      %p125 = por %p123, %p124
      %p126 = scmp.ne.s32.totalorder %s112, %s113
      %p127 = scmp.eq.s32.totalorder %s21, 1
      %p128 = por %p126, %p127
      %p130 = scmp.ne.s32.totalorder %s113, %s129
      %p131 = scmp.eq.s32.totalorder %s21, 0
      %p132 = por %p130, %p131
      %p133 = scmp.le.s32.totalorder 1, %s15
      %p134 = scmp.lt.s32.totalorder %s15, 3
      %p135 = pnand %p133, %p134
      %p136 = pneg %p135
      // Predicated region
      $region9: #{tpu_custom_call.1} parent=5 // pred_check
        _
      $region10: #{tpu_custom_call.1} parent=5 // pred_check_branch
        %138 = sbr.rel (%p135) target = $region12
      $region11: #{tpu_custom_call.1} parent=5 // pred_region
        %s139 = ssub.s32 %s15, 1
        // Predicated region
        $region13: #{tpu_custom_call.1} parent=11 // pred_check
          %p140 = pneg %p76
        $region14: #{tpu_custom_call.1} parent=11 // pred_check_branch
          %142 = sbr.rel (%p140) target = $region16
        $region15: #{tpu_custom_call.1} parent=11 // pred_region
          _
        $region16: #{tpu_custom_call.1} parent=11 // pred_fallthru
          _
        // Predicated region
        $region17: #{tpu_custom_call.1} parent=11 // pred_check
          %p143 = pneg %p97
        $region18: #{tpu_custom_call.1} parent=11 // pred_check_branch
          %145 = sbr.rel (%p143) target = $region20
        $region19: #{tpu_custom_call.1} parent=11 // pred_region
          _
        $region20: #{tpu_custom_call.1} parent=11 // pred_fallthru
          _
      $region12: #{tpu_custom_call.1} parent=5 // pred_fallthru
        _
      %p146 = scmp.lt.s32.totalorder %s15, 2
      // Predicated region
      $region21: #{tpu_custom_call.1} parent=5 // pred_check
        %p147 = pneg %p146
      $region22: #{tpu_custom_call.1} parent=5 // pred_check_branch
        %149 = sbr.rel (%p147) target = $region24
      $region23: #{tpu_custom_call.1} parent=5 // pred_region
        // Predicated region
        $region25: #{tpu_custom_call.1} parent=23 // pred_check
          %p150 = pneg %p49
        $region26: #{tpu_custom_call.1} parent=23 // pred_check_branch
          %152 = sbr.rel (%p150) target = $region28
        $region27: #{tpu_custom_call.1} parent=23 // pred_region
          %s153 = sand.u32 %s39, 1
          %s154 = scalar_lea.sflag [#allocation3], %s153
          %s155 = sand.u32 %s39, 1
          %s156 = smul.addr %s155, 32
          %s157 = scalar_lea.vmem [#allocation2], %s156
          %s158 = smul.u32 2, %s23
          %s160 = ssub.s32 512, 512
          %161 = vsyncadd %s154, %s160
          %s162 = smul.addr %s22, 4
          %s163 = sadd.s32 %s158, %s162
          %s164 = smul.addr %s163, 128
          %s165 = scalar_lea.hbm %s0, %s164
          %s166 = sshll.u32 %s157, 4
          %s167 = int_to_ptr.vmem [resolvable:$true] %s166
          %172 = dma.hbm_to_vmem [thread:$0]  %s165, 512, %s167, %s154, 256, 256, 16
        $region28: #{tpu_custom_call.1} parent=23 // pred_fallthru
          _
      $region24: #{tpu_custom_call.1} parent=5 // pred_fallthru
        _
      %p173 = scmp.le.s32.totalorder 1, %s15
      %p174 = scmp.lt.s32.totalorder %s15, 3
      %p175 = pnand %p173, %p174
      %p176 = pneg %p175
      // Predicated region
      $region29: #{tpu_custom_call.1} parent=5 // pred_check
        _
      $region30: #{tpu_custom_call.1} parent=5 // pred_check_branch
        %178 = sbr.rel (%p175) target = $region32
      $region31: #{tpu_custom_call.1} parent=5 // pred_region
        %s179 = ssub.s32 %s15, 1
        %s180 = sand.u32 %s42, 1
        %s181 = scalar_lea.sflag [#allocation3], %s180
        %s182 = sand.u32 %s42, 1
        %s183 = smul.addr %s182, 32
        %s184 = scalar_lea.vmem [#allocation2], %s183
        // Predicated region
        $region33: #{tpu_custom_call.1} parent=31 // pred_check
          %p185 = pneg %p55
        $region34: #{tpu_custom_call.1} parent=31 // pred_check_branch
          %187 = sbr.rel (%p185) target = $region36
        $region35: #{tpu_custom_call.1} parent=31 // pred_region
          %188 = dma.done %s181, 512
        $region36: #{tpu_custom_call.1} parent=31 // pred_fallthru
          _
        %s189 = sand.u32 %s42, 1
        %s190 = scalar_lea.sflag [#allocation3], %s189
        %s191 = sand.u32 %s42, 1
        %s192 = smul.addr %s191, 32
        %s193 = scalar_lea.vmem [#allocation2], %s192
        %p194 = pneg %p55
        %p195 = pneg %p52
        %p196 = pneg %p76
        %p197 = pneg %p73
        %p198 = pneg %p97
        %p199 = pneg %p94
        %p200 = pneg %p125
        %p201 = pneg %p122
        %s202 = sand.u32 %s112, 1
        %s203 = scalar_lea.sflag [#allocation4], %s202
        %s204 = sand.u32 %s112, 1
        %s205 = smul.addr %s204, 32
        %s206 = scalar_lea.vmem [#allocation5], %s205
        %s207 = smul.u32 2, %s25
        %s208 = smul.u32 2, %s25
        %v209 = vld [vmem:[%s1] sm:$0xff]
        %v210 = vld [vmem:[%s1 + $0x8] sm:$0xff]
        %v211 = vld [vmem:[%s184] sm:$0xff]
        %v212 = vld [vmem:[%s184 + $0x8] sm:$0xff]
        %v213 = vld [vmem:[%s184 + $0x10] sm:$0xff]
        %v214 = vld [vmem:[%s184 + $0x18] sm:$0xff]
        %v215 = vld [vmem:[%s2] sm:$0xff]
        %v216 = vld [vmem:[%s2 + $0x8] sm:$0xff]
        %218 = vset.pattern.permute.xlu0 0
        %219 = vperm.xlu0 %218, %v215
        %v220 = vpop.permute.xlu0 %219
        %223 = vset.pattern.permute.xlu0 0
        %224 = vperm.xlu0 %223, %v216
        %v225 = vpop.permute.xlu0 %224
        %vm227 = vcmask 130048
        %v229 = vsel %vm227, %v209, 0
        %v232 = vsel %vm227, %v210, 0
        %234 = vmatprep.subr.mxu0 0.0
        %235 = vmatpush1.msra.mxu0 0.0
        %236 = vmatprep.subr.mxu0 0.0
        %237 = vmatpush1.msra.mxu0 0.0
        %238 = vmatprep.subr.mxu0 0.0
        %239 = vmatpush1.msra.mxu0 0.0
        %240 = vmatprep.subr.mxu0 0.0
        %241 = vmatpush1.msra.mxu0 0.0
        %242 = vmatprep.subr.mxu0 0.0
        %243 = vmatpush1.msra.mxu0 0.0
        %244 = vmatprep.subr.mxu0 0.0
        %245 = vmatpush1.msra.mxu0 0.0
        %246 = vmatprep.subr.mxu0 0.0
        %247 = vmatpush1.msra.mxu0 0.0
        %248 = vmatprep.subr.mxu0 0.0
        %249 = vmatpush1.msra.mxu0 0.0
        %250 = vmatprep.subr.mxu0 0.0
        %251 = vmatpush1.msra.mxu0 0.0
        %252 = vmatprep.subr.mxu0 0.0
        %253 = vmatpush1.msra.mxu0 0.0
        %254 = vmatprep.subr.mxu0 0.0
        %255 = vmatpush1.msra.mxu0 0.0
        %256 = vmatprep.subr.mxu0 0.0
        %257 = vmatpush1.msra.mxu0 0.0
        %258 = vmatprep.subr.mxu0 0.0
        %259 = vmatpush1.msra.mxu0 0.0
        %260 = vmatprep.subr.mxu0 0.0
        %261 = vmatpush1.msra.mxu0 0.0
        %262 = vmatprep.subr.mxu0 %v214
        %263 = vmatpush1.msra.mxu0 %v213
        %264 = vmatprep.subr.mxu0 %v212
        %265 = vmatpush1.msra.mxu0 %v211
        %266 = vmatprep.subr.mxu0 0.0
        %267 = vmatpush2.msra.mxu0 0.0
        %268 = vmatprep.subr.mxu0 0.0
        %269 = vmatpush2.msra.mxu0 0.0
        %270 = vmatprep.subr.mxu0 0.0
        %271 = vmatpush2.msra.mxu0 0.0
        %272 = vmatprep.subr.mxu0 0.0
        %273 = vmatpush2.msra.mxu0 0.0
        %274 = vmatprep.subr.mxu0 0.0
        %275 = vmatpush2.msra.mxu0 0.0
        %276 = vmatprep.subr.mxu0 0.0
        %277 = vmatpush2.msra.mxu0 0.0
        %278 = vmatprep.subr.mxu0 0.0
        %279 = vmatpush2.msra.mxu0 0.0
        %280 = vmatprep.subr.mxu0 0.0
        %281 = vmatpush2.msra.mxu0 0.0
        %282 = vmatprep.subr.mxu0 0.0
        %283 = vmatpush2.msra.mxu0 0.0
        %284 = vmatprep.subr.mxu0 0.0
        %285 = vmatpush2.msra.mxu0 0.0
        %286 = vmatprep.subr.mxu0 0.0
        %287 = vmatpush2.msra.mxu0 0.0
        %288 = vmatprep.subr.mxu0 0.0
        %289 = vmatpush2.msra.mxu0 0.0
        %290 = vmatprep.subr.mxu0 0.0
        %291 = vmatpush2.msra.mxu0 0.0
        %292 = vmatprep.subr.mxu0 0.0
        %293 = vmatpush2.msra.mxu0 0.0
        %294 = vmatprep.subr.mxu0 0.0
        %295 = vmatpush2.msra.mxu0 0.0
        %296 = vmatprep.subr.mxu0 0.0
        %297 = vmatpush2.msra.mxu0 0.0
        %298 = vmatprep.mubr.f32.mxu0 0.0
        %299 = vmatmul.mubr.f32.gmra.mxu0 %v229
        %v300 = vpop.f32.mrf.mxu0
        %v301 = vadd.f32 %v220, %v300
        %v302 = vpop.f32.mrf.mxu0
        %v303 = vadd.f32 %v220, %v302
        %304 = vmatprep.mubr.f32.mxu0 0.0
        %305 = vmatmul.mubr.f32.gmra.mxu0 %v232
        %v306 = vpop.f32.mrf.mxu0
        %v307 = vadd.f32 %v225, %v306
        %v308 = vpop.f32.mrf.mxu0
        %v309 = vadd.f32 %v225, %v308
        %310 = vdwg.mxu0
        %311 = vst [vmem:[%s206] sm:$0xff] %v301
        %312 = vst [vmem:[%s206 + $0x8] sm:$0xff] %v303
        %313 = vst [vmem:[%s206 + $0x10] sm:$0xff] %v307
        %314 = vst [vmem:[%s206 + $0x18] sm:$0xff] %v309
        %s315 = sand.u32 %s112, 1
        %s316 = scalar_lea.sflag [#allocation4], %s315
        %s317 = sand.u32 %s112, 1
        %s318 = smul.addr %s317, 32
        %s319 = scalar_lea.vmem [#allocation5], %s318
        // Predicated region
        $region37: #{tpu_custom_call.1} parent=31 // pred_check
          %p320 = pneg %p122
        $region38: #{tpu_custom_call.1} parent=31 // pred_check_branch
          %322 = sbr.rel (%p320) target = $region40
        $region39: #{tpu_custom_call.1} parent=31 // pred_region
          %s323 = smul.u32 2, %s25
          %s325 = ssub.s32 512, 512
          %326 = vsyncadd %s316, %s325
          %s327 = smul.addr %s24, 4
          %s328 = sadd.s32 %s323, %s327
          %s329 = smul.addr %s328, 128
          %s330 = scalar_lea.hbm %s3, %s329
          %s331 = sshll.u32 %s319, 4
          %s332 = int_to_ptr.vmem [resolvable:$true] %s331
          %337 = dma.vmem_to_hbm [thread:$0]  %s332, 512, %s330, %s316, 256, 256, 16
        $region40: #{tpu_custom_call.1} parent=31 // pred_fallthru
          _
      $region32: #{tpu_custom_call.1} parent=5 // pred_fallthru
        _
      %p338 = scmp.le.s32.totalorder 2, %s15
      // Predicated region
      $region41: #{tpu_custom_call.1} parent=5 // pred_check
        %p339 = pneg %p338
      $region42: #{tpu_custom_call.1} parent=5 // pred_check_branch
        %341 = sbr.rel (%p339) target = $region44
      $region43: #{tpu_custom_call.1} parent=5 // pred_region
        %s342 = ssub.s32 %s15, 2
        // Predicated region
        $region45: #{tpu_custom_call.1} parent=43 // pred_check
          %p343 = pneg %p128
        $region46: #{tpu_custom_call.1} parent=43 // pred_check_branch
          %345 = sbr.rel (%p343) target = $region48
        $region47: #{tpu_custom_call.1} parent=43 // pred_region
          %s346 = sand.u32 %s113, 1
          %s347 = scalar_lea.sflag [#allocation4], %s346
          %s348 = sand.u32 %s113, 1
          %s349 = smul.addr %s348, 32
          %s350 = scalar_lea.vmem [#allocation5], %s349
          %351 = dma.done %s347, 512
        $region48: #{tpu_custom_call.1} parent=43 // pred_fallthru
          _
      $region44: #{tpu_custom_call.1} parent=5 // pred_fallthru
        _
    $region6: #{tpu_custom_call.1} parent=1 // loop_footer
      %s19 = sadd.s32 1, %s15
    $region7: #{tpu_custom_call.1} parent=1 // loop_footer_branch
      %14 = sbr.rel target = $region3
    $region8: #{tpu_custom_call.1} parent=1 // loop_exit
      _
    %352 = vsyncpa [#allocation3], 1
    %s353 = scalar_lea.sflag [#allocation3], 1
    %354 = vsyncpa %s353, 1
    %355 = vsyncpa [#allocation4], 1
    %s356 = scalar_lea.sflag [#allocation4], 1
    %357 = vsyncpa %s356, 1

</llo_original>
